<compile_context>
chip_gen: v5e
topology: v5e:2x2
jax: 0.10.0
libtpu: 0.0.40
codegen_flags: <defaults>
</compile_context>

<pallas_src>
import functools
import math

import jax
import jax.numpy as jnp
from jax.experimental import pallas as pl
from jax.experimental.pallas import tpu as pltpu

# --- model config (small, consistent with the module) ---
D_MODEL = 32
N_HEAD = 4
HEAD_DIM = D_MODEL // N_HEAD
SEQ = 8
BATCH = 2
LN_EPS = 1e-5


def _layernorm_f32(x, gamma, beta):
    """CLIP LayerNorm: compute in fp32, cast result back to the input dtype."""
    orig_dtype = x.dtype
    xf = x.astype(jnp.float32)
    mu = jnp.mean(xf, axis=-1, keepdims=True)
    var = jnp.mean((xf - mu) ** 2, axis=-1, keepdims=True)
    y = (xf - mu) * jax.lax.rsqrt(var + LN_EPS)
    return (y * gamma + beta).astype(orig_dtype)


def residual_block_kernel(x_ref, vecs_ref, w_qkv_ref, b_qkv_ref, w_out_ref,
                          w_fc_ref, b_fc_ref, w_proj_ref, o_ref,
                          *, batch, n_head):
    """Single invocation over the folded (N = L*B, D) token slab, all VMEM-resident."""
    x = x_ref[...]                       # (N, D) f32
    N, D = x.shape
    hd = D // n_head

    # Packed small vectors: rows = [ln1_g, ln1_b, ln2_g, ln2_b, b_out, b_proj, 0, 0].
    ln1_g = vecs_ref[0:1, :]
    ln1_b = vecs_ref[1:2, :]
    ln2_g = vecs_ref[2:3, :]
    ln2_b = vecs_ref[3:4, :]
    b_out = vecs_ref[4:5, :]
    b_proj = vecs_ref[5:6, :]

    # Block-diagonal additive mask generated in-kernel (two cheap VPU iota compares):
    # token row r of the folded slab belongs to batch element r % B, so attention is
    # restricted to same-batch pairs — identical to per-batch self-attention.
    row = jax.lax.broadcasted_iota(jnp.int32, (N, N), 0)
    col = jax.lax.broadcasted_iota(jnp.int32, (N, N), 1)
    mask = jnp.where((row % batch) == (col % batch),
                     jnp.float32(0.0), jnp.float32(-1e30))

    # ---------------- attention branch ----------------
    xn = _layernorm_f32(x, ln1_g, ln1_b)

    # One fused, lane-dense (N, D) @ (D, 3D) projection; scale already folded into q.
    qkv = jnp.dot(xn, w_qkv_ref[...],
                  preferred_element_type=jnp.float32) + b_qkv_ref[...]   # (N, 3D)

    hv_parts = []
    for h in range(n_head):              # static, fully unrolled (4 iterations)
        q_h = qkv[:, h * hd:(h + 1) * hd]                    # (N, hd)
        k_h = qkv[:, D + h * hd:D + (h + 1) * hd]            # (N, hd)
        v_h = qkv[:, 2 * D + h * hd:2 * D + (h + 1) * hd]    # (N, hd)

        # Scores over all N tokens; cross-batch pairs masked out -> per-batch softmax.
        s = jax.lax.dot_general(q_h, k_h, (((1,), (1,)), ((), ())),
                                preferred_element_type=jnp.float32) + mask
        s = s - jnp.max(s, axis=-1, keepdims=True)
        p = jnp.exp(s)
        p = p / jnp.sum(p, axis=-1, keepdims=True)

        hv_parts.append(jnp.dot(p, v_h, preferred_element_type=jnp.float32))

    # Concatenate heads (lane-dense (N, D)) and run ONE out-projection matmul.
    hv = jnp.concatenate(hv_parts, axis=-1)                   # (N, D)
    attn_out = jnp.dot(hv, w_out_ref[...],
                       preferred_element_type=jnp.float32) + b_out
    x1 = x + attn_out

    # ---------------- MLP branch ----------------
    xn2 = _layernorm_f32(x1, ln2_g, ln2_b)
    hdn = jnp.dot(xn2, w_fc_ref[...],
                  preferred_element_type=jnp.float32) + b_fc_ref[...]    # (N, 4D)
    hdn = hdn * jax.nn.sigmoid(1.702 * hdn)                   # QuickGELU
    mlp = jnp.dot(hdn, w_proj_ref[...],
                  preferred_element_type=jnp.float32) + b_proj

    o_ref[...] = (x1 + mlp).astype(o_ref.dtype)


def prepare_kernel_inputs(p):
    """One-time weight re-layout (outside the kernel):
       * qkv weight transposed to a single lane-dense (D, 3D) matrix, scale folded into q,
       * out-proj / fc / proj weights transposed to lane-dense 2-D layouts,
       * all (D,)-length vectors packed into one (8, D) array (one DMA)."""
    D = D_MODEL
    scale = jnp.float32(1.0 / math.sqrt(HEAD_DIM))

    # Fold 1/sqrt(head_dim) into the q third of the in-projection.
    scale_vec = jnp.concatenate([jnp.full((D,), scale, jnp.float32),
                                 jnp.ones((2 * D,), jnp.float32)])
    w_qkv_t = (p["w_qkv"].astype(jnp.float32) * scale_vec[:, None]).T      # (D, 3D)
    b_qkv = (p["b_qkv"].astype(jnp.float32) * scale_vec).reshape(1, 3 * D)

    vecs = jnp.stack([p["ln1_g"], p["ln1_b"], p["ln2_g"], p["ln2_b"],
                      p["b_out"], p["b_proj"],
                      jnp.zeros((D,), jnp.float32),
                      jnp.zeros((D,), jnp.float32)], axis=0).astype(jnp.float32)

    return dict(
        vecs=vecs,                                   # (8, D)
        w_qkv_t=w_qkv_t, b_qkv=b_qkv,                # (D, 3D), (1, 3D)
        w_out_t=p["w_out"].T.astype(jnp.float32),    # (D, D)
        w_fc_t=p["w_fc"].T.astype(jnp.float32),      # (D, 4D)
        b_fc=p["b_fc"].reshape(1, -1).astype(jnp.float32),   # (1, 4D)
        w_proj_t=p["w_proj"].T.astype(jnp.float32),  # (4D, D)
    )


def residual_attention_block(x_lbd, params):
    """x_lbd: (L, B, D) like PyTorch nn.MultiheadAttention; returns (L, B, D)."""
    L, B, D = x_lbd.shape
    N = L * B
    # Free row-major reshape (no transpose, no extra HBM round trip):
    # token row r corresponds to (l = r // B, b = r % B).
    x2d = x_lbd.reshape(N, D)

    kp = prepare_kernel_inputs(params)
    kern = functools.partial(residual_block_kernel, batch=B, n_head=N_HEAD)

    n_inputs = 8
    vmem_specs = [pl.BlockSpec(memory_space=pltpu.MemorySpace.VMEM)
                  for _ in range(n_inputs)]

    out2d = pl.pallas_call(
        kern,
        out_shape=jax.ShapeDtypeStruct((N, D), x_lbd.dtype),
        in_specs=vmem_specs,
        out_specs=pl.BlockSpec(memory_space=pltpu.MemorySpace.VMEM),
        # Gridless: the whole problem (a few KiB) runs as one invocation with every
        # operand VMEM-resident — no per-step pipeline overhead.  At real CLIP sizes
        # add a "parallel" grid axis over (batch / q-tile) and stream K/V instead.
    )(x2d, kp["vecs"], kp["w_qkv_t"], kp["b_qkv"], kp["w_out_t"],
      kp["w_fc_t"], kp["b_fc"], kp["w_proj_t"])

    return out2d.reshape(L, B, D)


def reference(x_lbd, p):
    """Pure-JAX reference matching PyTorch semantics of the standard path."""
    def ln(x, g, b):
        mu = x.mean(-1, keepdims=True)
        var = ((x - mu) ** 2).mean(-1, keepdims=True)
        return (x - mu) / jnp.sqrt(var + LN_EPS) * g + b

    L, B, D = x_lbd.shape
    xn = ln(x_lbd, p["ln1_g"], p["ln1_b"])
    qkv = xn @ p["w_qkv"].T + p["b_qkv"]
    q, k, v = jnp.split(qkv, 3, axis=-1)

    def heads(t):  # (L, B, D) -> (B*H, L, hd)
        return t.reshape(L, B * N_HEAD, HEAD_DIM).transpose(1, 0, 2)

    qh, kh, vh = heads(q), heads(k), heads(v)
    s = (qh / math.sqrt(HEAD_DIM)) @ kh.transpose(0, 2, 1)
    a = jax.nn.softmax(s, axis=-1)
    o = a @ vh
    o = o.transpose(1, 0, 2).reshape(L, B, D)
    o = o @ p["w_out"].T + p["b_out"]
    x1 = x_lbd + o

    xn2 = ln(x1, p["ln2_g"], p["ln2_b"])
    h = xn2 @ p["w_fc"].T + p["b_fc"]
    h = h * jax.nn.sigmoid(1.702 * h)
    m = h @ p["w_proj"].T + p["b_proj"]
    return x1 + m


def make_params(key):
    ks = jax.random.split(key, 8)
    D = D_MODEL
    return {
        "ln1_g": jnp.ones((D,), jnp.float32),
        "ln1_b": jnp.zeros((D,), jnp.float32),
        "ln2_g": jnp.ones((D,), jnp.float32),
        "ln2_b": jnp.zeros((D,), jnp.float32),
        "w_qkv": 0.05 * jax.random.normal(ks[0], (3 * D, D), jnp.float32),
        "b_qkv": 0.01 * jax.random.normal(ks[1], (3 * D,), jnp.float32),
        "w_out": 0.05 * jax.random.normal(ks[2], (D, D), jnp.float32),
        "b_out": 0.01 * jax.random.normal(ks[3], (D,), jnp.float32),
        "w_fc": 0.05 * jax.random.normal(ks[4], (4 * D, D), jnp.float32),
        "b_fc": 0.01 * jax.random.normal(ks[5], (4 * D,), jnp.float32),
        "w_proj": 0.05 * jax.random.normal(ks[6], (D, 4 * D), jnp.float32),
        "b_proj": 0.01 * jax.random.normal(ks[7], (D,), jnp.float32),
    }


if __name__ == "__main__":
    key = jax.random.PRNGKey(0)
    k_x, k_p = jax.random.split(key)
    x = jax.random.normal(k_x, (SEQ, BATCH, D_MODEL), jnp.float32)  # (L, B, D)
    params = make_params(k_p)

    fwd = jax.jit(residual_attention_block)
    out = jax.block_until_ready(fwd(x, params))

    ref = reference(x, params)
    assert out.shape == ref.shape == (SEQ, BATCH, D_MODEL)
    assert jnp.allclose(out, ref, rtol=1e-3, atol=1e-3), "mismatch vs reference"

    print("KERNEL_OK")
</pallas_src>

<mosaic_0001>
module attributes {stable_mosaic.version = 11 : i64} {
  func.func @residual_block_kernel(%arg0: memref<16x32xf32, #tpu.memory_space<vmem>>, %arg1: memref<8x32xf32, #tpu.memory_space<vmem>>, %arg2: memref<32x96xf32, #tpu.memory_space<vmem>>, %arg3: memref<1x96xf32, #tpu.memory_space<vmem>>, %arg4: memref<32x32xf32, #tpu.memory_space<vmem>>, %arg5: memref<32x128xf32, #tpu.memory_space<vmem>>, %arg6: memref<1x128xf32, #tpu.memory_space<vmem>>, %arg7: memref<128x32xf32, #tpu.memory_space<vmem>>, %arg8: memref<16x32xf32, #tpu.memory_space<vmem>>) attributes {dimension_semantics = [], scalar_prefetch = 0 : i64, scratch_operands = 0 : i64, tpu.core_type = #tpu.core_type<tc>} {
    %c0 = arith.constant 0 : index
    %c0_0 = arith.constant 0 : index
    %0 = vector.load %arg0[%c0, %c0_0] : memref<16x32xf32, #tpu.memory_space<vmem>>, vector<16x32xf32>
    %c0_1 = arith.constant 0 : index
    %c0_2 = arith.constant 0 : index
    %1 = vector.load %arg1[%c0_1, %c0_2] : memref<8x32xf32, #tpu.memory_space<vmem>>, vector<1x32xf32>
    %c1 = arith.constant 1 : index
    %c0_3 = arith.constant 0 : index
    %2 = vector.load %arg1[%c1, %c0_3] : memref<8x32xf32, #tpu.memory_space<vmem>>, vector<1x32xf32>
    %c2 = arith.constant 2 : index
    %c0_4 = arith.constant 0 : index
    %3 = vector.load %arg1[%c2, %c0_4] : memref<8x32xf32, #tpu.memory_space<vmem>>, vector<1x32xf32>
    %c3 = arith.constant 3 : index
    %c0_5 = arith.constant 0 : index
    %4 = vector.load %arg1[%c3, %c0_5] : memref<8x32xf32, #tpu.memory_space<vmem>>, vector<1x32xf32>
    %c4 = arith.constant 4 : index
    %c0_6 = arith.constant 0 : index
    %5 = vector.load %arg1[%c4, %c0_6] : memref<8x32xf32, #tpu.memory_space<vmem>>, vector<1x32xf32>
    %c5 = arith.constant 5 : index
    %c0_7 = arith.constant 0 : index
    %6 = vector.load %arg1[%c5, %c0_7] : memref<8x32xf32, #tpu.memory_space<vmem>>, vector<1x32xf32>
    %7 = tpu.iota {dimensions = array<i32: 0>} : vector<16x16xi32>
    %8 = tpu.iota {dimensions = array<i32: 1>} : vector<16x16xi32>
    %c2_i32 = arith.constant 2 : i32
    %c0_i32 = arith.constant 0 : i32
    %9 = arith.cmpi eq, %c2_i32, %c0_i32 : i32
    %c1_i32 = arith.constant 1 : i32
    %10 = arith.select %9, %c1_i32, %c2_i32 : i32
    %11 = vector.broadcast %10 : i32 to vector<16x16xi32>
    %12 = arith.remsi %7, %11 : vector<16x16xi32>
    %c0_i32_8 = arith.constant 0 : i32
    %13 = vector.broadcast %c0_i32_8 : i32 to vector<16x16xi32>
    %14 = arith.cmpi ne, %12, %13 : vector<16x16xi32>
    %c0_i32_9 = arith.constant 0 : i32
    %15 = vector.broadcast %c0_i32_9 : i32 to vector<16x16xi32>
    %16 = arith.cmpi slt, %12, %15 : vector<16x16xi32>
    %c0_i32_10 = arith.constant 0 : i32
    %17 = arith.cmpi slt, %10, %c0_i32_10 : i32
    %18 = vector.broadcast %17 : i1 to vector<16x16xi1>
    %19 = vector.broadcast %18 : vector<16x16xi1> to vector<16x16xi1>
    %20 = arith.xori %16, %19 : vector<16x16xi1>
    %21 = arith.andi %20, %14 : vector<16x16xi1>
    %22 = vector.broadcast %10 : i32 to vector<16x16xi32>
    %23 = arith.addi %12, %22 : vector<16x16xi32>
    %24 = arith.select %21, %23, %12 : vector<16x16xi1>, vector<16x16xi32>
    %c2_i32_11 = arith.constant 2 : i32
    %c0_i32_12 = arith.constant 0 : i32
    %25 = arith.cmpi eq, %c2_i32_11, %c0_i32_12 : i32
    %c1_i32_13 = arith.constant 1 : i32
    %26 = arith.select %25, %c1_i32_13, %c2_i32_11 : i32
    %27 = vector.broadcast %26 : i32 to vector<16x16xi32>
    %28 = arith.remsi %8, %27 : vector<16x16xi32>
    %c0_i32_14 = arith.constant 0 : i32
    %29 = vector.broadcast %c0_i32_14 : i32 to vector<16x16xi32>
    %30 = arith.cmpi ne, %28, %29 : vector<16x16xi32>
    %c0_i32_15 = arith.constant 0 : i32
    %31 = vector.broadcast %c0_i32_15 : i32 to vector<16x16xi32>
    %32 = arith.cmpi slt, %28, %31 : vector<16x16xi32>
    %c0_i32_16 = arith.constant 0 : i32
    %33 = arith.cmpi slt, %26, %c0_i32_16 : i32
    %34 = vector.broadcast %33 : i1 to vector<16x16xi1>
    %35 = vector.broadcast %34 : vector<16x16xi1> to vector<16x16xi1>
    %36 = arith.xori %32, %35 : vector<16x16xi1>
    %37 = arith.andi %36, %30 : vector<16x16xi1>
    %38 = vector.broadcast %26 : i32 to vector<16x16xi32>
    %39 = arith.addi %28, %38 : vector<16x16xi32>
    %40 = arith.select %37, %39, %28 : vector<16x16xi1>, vector<16x16xi32>
    %41 = arith.cmpi eq, %24, %40 : vector<16x16xi32>
    %cst = arith.constant 0.000000e+00 : f32
    %cst_17 = arith.constant -1.000000e+30 : f32
    %42 = vector.broadcast %cst : f32 to vector<16x16xf32>
    %43 = vector.broadcast %cst_17 : f32 to vector<16x16xf32>
    %44 = arith.select %41, %42, %43 : vector<16x16xi1>, vector<16x16xf32>
    %cst_18 = arith.constant dense<0.000000e+00> : vector<16xf32>
    %45 = vector.multi_reduction <add>, %0, %cst_18 [1] : vector<16x32xf32> to vector<16xf32>
    %46 = vector.shape_cast %45 : vector<16xf32> to vector<16x1xf32>
    %cst_19 = arith.constant 3.200000e+01 : f32
    %47 = vector.broadcast %cst_19 : f32 to vector<16x1xf32>
    %48 = arith.divf %46, %47 : vector<16x1xf32>
    %49 = vector.broadcast %48 : vector<16x1xf32> to vector<16x32xf32>
    %50 = arith.subf %0, %49 : vector<16x32xf32>
    %51 = arith.mulf %50, %50 : vector<16x32xf32>
    %cst_20 = arith.constant dense<0.000000e+00> : vector<16xf32>
    %52 = vector.multi_reduction <add>, %51, %cst_20 [1] : vector<16x32xf32> to vector<16xf32>
    %53 = vector.shape_cast %52 : vector<16xf32> to vector<16x1xf32>
    %cst_21 = arith.constant 3.200000e+01 : f32
    %54 = vector.broadcast %cst_21 : f32 to vector<16x1xf32>
    %55 = arith.divf %53, %54 : vector<16x1xf32>
    %56 = vector.broadcast %48 : vector<16x1xf32> to vector<16x32xf32>
    %57 = arith.subf %0, %56 : vector<16x32xf32>
    %cst_22 = arith.constant 9.99999974E-6 : f32
    %58 = vector.broadcast %cst_22 : f32 to vector<16x1xf32>
    %59 = arith.addf %55, %58 : vector<16x1xf32>
    %60 = math.rsqrt %59 : vector<16x1xf32>
    %61 = vector.broadcast %60 : vector<16x1xf32> to vector<16x32xf32>
    %62 = arith.mulf %57, %61 : vector<16x32xf32>
    %63 = vector.broadcast %1 : vector<1x32xf32> to vector<16x32xf32>
    %64 = arith.mulf %62, %63 : vector<16x32xf32>
    %65 = vector.broadcast %2 : vector<1x32xf32> to vector<16x32xf32>
    %66 = arith.addf %64, %65 : vector<16x32xf32>
    %c0_23 = arith.constant 0 : index
    %c0_24 = arith.constant 0 : index
    %67 = vector.load %arg2[%c0_23, %c0_24] : memref<32x96xf32, #tpu.memory_space<vmem>>, vector<32x96xf32>
    %cst_25 = arith.constant dense<0.000000e+00> : vector<16x96xf32>
    %68 = tpu.matmul %66, %67, %cst_25 {dimension_numbers = #tpu.dot_dimension_numbers<[1], [0], [0], [1], [0, 0, 1, 1], [], []>} : vector<16x32xf32>, vector<32x96xf32>, vector<16x96xf32> -> vector<16x96xf32>
    %c0_26 = arith.constant 0 : index
    %c0_27 = arith.constant 0 : index
    %69 = vector.load %arg3[%c0_26, %c0_27] : memref<1x96xf32, #tpu.memory_space<vmem>>, vector<1x96xf32>
    %70 = vector.broadcast %69 : vector<1x96xf32> to vector<16x96xf32>
    %71 = arith.addf %68, %70 : vector<16x96xf32>
    %72 = vector.extract_strided_slice %71 {offsets = [0, 0], sizes = [16, 8], strides = [1, 1]} : vector<16x96xf32> to vector<16x8xf32>
    %73 = vector.extract_strided_slice %71 {offsets = [0, 32], sizes = [16, 8], strides = [1, 1]} : vector<16x96xf32> to vector<16x8xf32>
    %74 = vector.extract_strided_slice %71 {offsets = [0, 64], sizes = [16, 8], strides = [1, 1]} : vector<16x96xf32> to vector<16x8xf32>
    %cst_28 = arith.constant dense<0.000000e+00> : vector<16x16xf32>
    %75 = tpu.matmul %72, %73, %cst_28 {dimension_numbers = #tpu.dot_dimension_numbers<[1], [1], [0], [0], [0, 0, 1, 0], [], []>} : vector<16x8xf32>, vector<16x8xf32>, vector<16x16xf32> -> vector<16x16xf32>
    %76 = arith.addf %75, %44 : vector<16x16xf32>
    %cst_29 = arith.constant dense<0xFF800000> : vector<16xf32>
    %77 = vector.multi_reduction <maximumf>, %76, %cst_29 [1] : vector<16x16xf32> to vector<16xf32>
    %78 = vector.shape_cast %77 : vector<16xf32> to vector<16x1xf32>
    %79 = vector.broadcast %78 : vector<16x1xf32> to vector<16x16xf32>
    %80 = arith.subf %76, %79 : vector<16x16xf32>
    %81 = math.exp %80 : vector<16x16xf32>
    %cst_30 = arith.constant dense<0.000000e+00> : vector<16xf32>
    %82 = vector.multi_reduction <add>, %81, %cst_30 [1] : vector<16x16xf32> to vector<16xf32>
    %83 = vector.shape_cast %82 : vector<16xf32> to vector<16x1xf32>
    %84 = vector.broadcast %83 : vector<16x1xf32> to vector<16x16xf32>
    %85 = arith.divf %81, %84 : vector<16x16xf32>
    %cst_31 = arith.constant dense<0.000000e+00> : vector<16x8xf32>
    %86 = tpu.matmul %85, %74, %cst_31 {dimension_numbers = #tpu.dot_dimension_numbers<[1], [0], [0], [1], [0, 0, 1, 1], [], []>} : vector<16x16xf32>, vector<16x8xf32>, vector<16x8xf32> -> vector<16x8xf32>
    %87 = vector.extract_strided_slice %71 {offsets = [0, 8], sizes = [16, 8], strides = [1, 1]} : vector<16x96xf32> to vector<16x8xf32>
    %88 = vector.extract_strided_slice %71 {offsets = [0, 40], sizes = [16, 8], strides = [1, 1]} : vector<16x96xf32> to vector<16x8xf32>
    %89 = vector.extract_strided_slice %71 {offsets = [0, 72], sizes = [16, 8], strides = [1, 1]} : vector<16x96xf32> to vector<16x8xf32>
    %cst_32 = arith.constant dense<0.000000e+00> : vector<16x16xf32>
    %90 = tpu.matmul %87, %88, %cst_32 {dimension_numbers = #tpu.dot_dimension_numbers<[1], [1], [0], [0], [0, 0, 1, 0], [], []>} : vector<16x8xf32>, vector<16x8xf32>, vector<16x16xf32> -> vector<16x16xf32>
    %91 = arith.addf %90, %44 : vector<16x16xf32>
    %cst_33 = arith.constant dense<0xFF800000> : vector<16xf32>
    %92 = vector.multi_reduction <maximumf>, %91, %cst_33 [1] : vector<16x16xf32> to vector<16xf32>
    %93 = vector.shape_cast %92 : vector<16xf32> to vector<16x1xf32>
    %94 = vector.broadcast %93 : vector<16x1xf32> to vector<16x16xf32>
    %95 = arith.subf %91, %94 : vector<16x16xf32>
    %96 = math.exp %95 : vector<16x16xf32>
    %cst_34 = arith.constant dense<0.000000e+00> : vector<16xf32>
    %97 = vector.multi_reduction <add>, %96, %cst_34 [1] : vector<16x16xf32> to vector<16xf32>
    %98 = vector.shape_cast %97 : vector<16xf32> to vector<16x1xf32>
    %99 = vector.broadcast %98 : vector<16x1xf32> to vector<16x16xf32>
    %100 = arith.divf %96, %99 : vector<16x16xf32>
    %cst_35 = arith.constant dense<0.000000e+00> : vector<16x8xf32>
    %101 = tpu.matmul %100, %89, %cst_35 {dimension_numbers = #tpu.dot_dimension_numbers<[1], [0], [0], [1], [0, 0, 1, 1], [], []>} : vector<16x16xf32>, vector<16x8xf32>, vector<16x8xf32> -> vector<16x8xf32>
    %102 = vector.extract_strided_slice %71 {offsets = [0, 16], sizes = [16, 8], strides = [1, 1]} : vector<16x96xf32> to vector<16x8xf32>
    %103 = vector.extract_strided_slice %71 {offsets = [0, 48], sizes = [16, 8], strides = [1, 1]} : vector<16x96xf32> to vector<16x8xf32>
    %104 = vector.extract_strided_slice %71 {offsets = [0, 80], sizes = [16, 8], strides = [1, 1]} : vector<16x96xf32> to vector<16x8xf32>
    %cst_36 = arith.constant dense<0.000000e+00> : vector<16x16xf32>
    %105 = tpu.matmul %102, %103, %cst_36 {dimension_numbers = #tpu.dot_dimension_numbers<[1], [1], [0], [0], [0, 0, 1, 0], [], []>} : vector<16x8xf32>, vector<16x8xf32>, vector<16x16xf32> -> vector<16x16xf32>
    %106 = arith.addf %105, %44 : vector<16x16xf32>
    %cst_37 = arith.constant dense<0xFF800000> : vector<16xf32>
    %107 = vector.multi_reduction <maximumf>, %106, %cst_37 [1] : vector<16x16xf32> to vector<16xf32>
    %108 = vector.shape_cast %107 : vector<16xf32> to vector<16x1xf32>
    %109 = vector.broadcast %108 : vector<16x1xf32> to vector<16x16xf32>
    %110 = arith.subf %106, %109 : vector<16x16xf32>
    %111 = math.exp %110 : vector<16x16xf32>
    %cst_38 = arith.constant dense<0.000000e+00> : vector<16xf32>
    %112 = vector.multi_reduction <add>, %111, %cst_38 [1] : vector<16x16xf32> to vector<16xf32>
    %113 = vector.shape_cast %112 : vector<16xf32> to vector<16x1xf32>
    %114 = vector.broadcast %113 : vector<16x1xf32> to vector<16x16xf32>
    %115 = arith.divf %111, %114 : vector<16x16xf32>
    %cst_39 = arith.constant dense<0.000000e+00> : vector<16x8xf32>
    %116 = tpu.matmul %115, %104, %cst_39 {dimension_numbers = #tpu.dot_dimension_numbers<[1], [0], [0], [1], [0, 0, 1, 1], [], []>} : vector<16x16xf32>, vector<16x8xf32>, vector<16x8xf32> -> vector<16x8xf32>
    %117 = vector.extract_strided_slice %71 {offsets = [0, 24], sizes = [16, 8], strides = [1, 1]} : vector<16x96xf32> to vector<16x8xf32>
    %118 = vector.extract_strided_slice %71 {offsets = [0, 56], sizes = [16, 8], strides = [1, 1]} : vector<16x96xf32> to vector<16x8xf32>
    %119 = vector.extract_strided_slice %71 {offsets = [0, 88], sizes = [16, 8], strides = [1, 1]} : vector<16x96xf32> to vector<16x8xf32>
    %cst_40 = arith.constant dense<0.000000e+00> : vector<16x16xf32>
    %120 = tpu.matmul %117, %118, %cst_40 {dimension_numbers = #tpu.dot_dimension_numbers<[1], [1], [0], [0], [0, 0, 1, 0], [], []>} : vector<16x8xf32>, vector<16x8xf32>, vector<16x16xf32> -> vector<16x16xf32>
    %121 = arith.addf %120, %44 : vector<16x16xf32>
    %cst_41 = arith.constant dense<0xFF800000> : vector<16xf32>
    %122 = vector.multi_reduction <maximumf>, %121, %cst_41 [1] : vector<16x16xf32> to vector<16xf32>
    %123 = vector.shape_cast %122 : vector<16xf32> to vector<16x1xf32>
    %124 = vector.broadcast %123 : vector<16x1xf32> to vector<16x16xf32>
    %125 = arith.subf %121, %124 : vector<16x16xf32>
    %126 = math.exp %125 : vector<16x16xf32>
    %cst_42 = arith.constant dense<0.000000e+00> : vector<16xf32>
    %127 = vector.multi_reduction <add>, %126, %cst_42 [1] : vector<16x16xf32> to vector<16xf32>
    %128 = vector.shape_cast %127 : vector<16xf32> to vector<16x1xf32>
    %129 = vector.broadcast %128 : vector<16x1xf32> to vector<16x16xf32>
    %130 = arith.divf %126, %129 : vector<16x16xf32>
    %cst_43 = arith.constant dense<0.000000e+00> : vector<16x8xf32>
    %131 = tpu.matmul %130, %119, %cst_43 {dimension_numbers = #tpu.dot_dimension_numbers<[1], [0], [0], [1], [0, 0, 1, 1], [], []>} : vector<16x16xf32>, vector<16x8xf32>, vector<16x8xf32> -> vector<16x8xf32>
    %132 = tpu.concatenate %86, %101, %116, %131 in 1 : vector<16x8xf32>, vector<16x8xf32>, vector<16x8xf32>, vector<16x8xf32> -> vector<16x32xf32>
    %c0_44 = arith.constant 0 : index
    %c0_45 = arith.constant 0 : index
    %133 = vector.load %arg4[%c0_44, %c0_45] : memref<32x32xf32, #tpu.memory_space<vmem>>, vector<32x32xf32>
    %cst_46 = arith.constant dense<0.000000e+00> : vector<16x32xf32>
    %134 = tpu.matmul %132, %133, %cst_46 {dimension_numbers = #tpu.dot_dimension_numbers<[1], [0], [0], [1], [0, 0, 1, 1], [], []>} : vector<16x32xf32>, vector<32x32xf32>, vector<16x32xf32> -> vector<16x32xf32>
    %135 = vector.broadcast %5 : vector<1x32xf32> to vector<16x32xf32>
    %136 = arith.addf %134, %135 : vector<16x32xf32>
    %137 = arith.addf %0, %136 : vector<16x32xf32>
    %cst_47 = arith.constant dense<0.000000e+00> : vector<16xf32>
    %138 = vector.multi_reduction <add>, %137, %cst_47 [1] : vector<16x32xf32> to vector<16xf32>
    %139 = vector.shape_cast %138 : vector<16xf32> to vector<16x1xf32>
    %cst_48 = arith.constant 3.200000e+01 : f32
    %140 = vector.broadcast %cst_48 : f32 to vector<16x1xf32>
    %141 = arith.divf %139, %140 : vector<16x1xf32>
    %142 = vector.broadcast %141 : vector<16x1xf32> to vector<16x32xf32>
    %143 = arith.subf %137, %142 : vector<16x32xf32>
    %144 = arith.mulf %143, %143 : vector<16x32xf32>
    %cst_49 = arith.constant dense<0.000000e+00> : vector<16xf32>
    %145 = vector.multi_reduction <add>, %144, %cst_49 [1] : vector<16x32xf32> to vector<16xf32>
    %146 = vector.shape_cast %145 : vector<16xf32> to vector<16x1xf32>
    %cst_50 = arith.constant 3.200000e+01 : f32
    %147 = vector.broadcast %cst_50 : f32 to vector<16x1xf32>
    %148 = arith.divf %146, %147 : vector<16x1xf32>
    %149 = vector.broadcast %141 : vector<16x1xf32> to vector<16x32xf32>
    %150 = arith.subf %137, %149 : vector<16x32xf32>
    %cst_51 = arith.constant 9.99999974E-6 : f32
    %151 = vector.broadcast %cst_51 : f32 to vector<16x1xf32>
    %152 = arith.addf %148, %151 : vector<16x1xf32>
    %153 = math.rsqrt %152 : vector<16x1xf32>
    %154 = vector.broadcast %153 : vector<16x1xf32> to vector<16x32xf32>
    %155 = arith.mulf %150, %154 : vector<16x32xf32>
    %156 = vector.broadcast %3 : vector<1x32xf32> to vector<16x32xf32>
    %157 = arith.mulf %155, %156 : vector<16x32xf32>
    %158 = vector.broadcast %4 : vector<1x32xf32> to vector<16x32xf32>
    %159 = arith.addf %157, %158 : vector<16x32xf32>
    %c0_52 = arith.constant 0 : index
    %c0_53 = arith.constant 0 : index
    %160 = vector.load %arg5[%c0_52, %c0_53] : memref<32x128xf32, #tpu.memory_space<vmem>>, vector<32x128xf32>
    %cst_54 = arith.constant dense<0.000000e+00> : vector<16x128xf32>
    %161 = tpu.matmul %159, %160, %cst_54 {dimension_numbers = #tpu.dot_dimension_numbers<[1], [0], [0], [1], [0, 0, 1, 1], [], []>} : vector<16x32xf32>, vector<32x128xf32>, vector<16x128xf32> -> vector<16x128xf32>
    %c0_55 = arith.constant 0 : index
    %c0_56 = arith.constant 0 : index
    %162 = vector.load %arg6[%c0_55, %c0_56] : memref<1x128xf32, #tpu.memory_space<vmem>>, vector<1x128xf32>
    %163 = vector.broadcast %162 : vector<1x128xf32> to vector<16x128xf32>
    %164 = arith.addf %161, %163 : vector<16x128xf32>
    %cst_57 = arith.constant 1.702000e+00 : f32
    %165 = vector.broadcast %cst_57 : f32 to vector<16x128xf32>
    %166 = arith.mulf %165, %164 : vector<16x128xf32>
    %167 = arith.negf %166 : vector<16x128xf32>
    %168 = math.exp %167 : vector<16x128xf32>
    %cst_58 = arith.constant 1.000000e+00 : f32
    %169 = vector.broadcast %cst_58 : f32 to vector<16x128xf32>
    %170 = arith.addf %169, %168 : vector<16x128xf32>
    %171 = arith.divf %169, %170 : vector<16x128xf32>
    %172 = arith.mulf %164, %171 : vector<16x128xf32>
    %c0_59 = arith.constant 0 : index
    %c0_60 = arith.constant 0 : index
    %173 = vector.load %arg7[%c0_59, %c0_60] : memref<128x32xf32, #tpu.memory_space<vmem>>, vector<128x32xf32>
    %cst_61 = arith.constant dense<0.000000e+00> : vector<16x32xf32>
    %174 = tpu.matmul %172, %173, %cst_61 {dimension_numbers = #tpu.dot_dimension_numbers<[1], [0], [0], [1], [0, 0, 1, 1], [], []>} : vector<16x128xf32>, vector<128x32xf32>, vector<16x32xf32> -> vector<16x32xf32>
    %175 = vector.broadcast %6 : vector<1x32xf32> to vector<16x32xf32>
    %176 = arith.addf %174, %175 : vector<16x32xf32>
    %177 = arith.addf %137, %176 : vector<16x32xf32>
    %c0_62 = arith.constant 0 : index
    %c0_63 = arith.constant 0 : index
    %178 = vector.load %arg8[%c0_62, %c0_63] : memref<16x32xf32, #tpu.memory_space<vmem>>, vector<16x32xf32>
    tpu.vector_store %arg8[%c0_62, %c0_63], %177 {strides = array<i32>} : memref<16x32xf32, #tpu.memory_space<vmem>>, vector<16x32xf32>,
    return
  }
}

</mosaic_0001>

<llo_original>
// kernel: residual_attention_block.1
$region0: #{residual_attention_block.1}
  #allocation0 [shape = 'u32[]', space=smem, size = 0x4, offset = 0x4, fixed_abs, tag = 'smem constant byte address 0x4 - core index']
  #allocation1 [shape = 'u32[72,128]{1,0:T(1,128)}', space=vmem, size = 0x9000, scoped, tag = 'internal scratch']
  %s0 = inlined_call_operand.vmem [shape: f32[16,32], index: 0, kind: input, shape index: {}]
  %s1 = inlined_call_operand.vmem [shape: f32[8,32], index: 1, kind: input, shape index: {}]
  %s2 = inlined_call_operand.vmem [shape: f32[32,96], index: 2, kind: input, shape index: {}]
  %s3 = inlined_call_operand.vmem [shape: f32[1,96], index: 3, kind: input, shape index: {}]
  %s4 = inlined_call_operand.vmem [shape: f32[32,32], index: 4, kind: input, shape index: {}]
  %s5 = inlined_call_operand.vmem [shape: f32[32,128], index: 5, kind: input, shape index: {}]
  %s6 = inlined_call_operand.vmem [shape: f32[1,128], index: 6, kind: input, shape index: {}]
  %s7 = inlined_call_operand.vmem [shape: f32[128,32], index: 7, kind: input, shape index: {}]
  %s8 = inlined_call_operand.hbm [shape: f32[16,32], index: 8, kind: output, shape index: {}]
  %s9 = sld [smem:[#allocation0]]
  $region42: #{residual_attention_block.1} parent=0
    _
  %s11 = ssub.s32 1, %s9
  %s12 = scalar_select 0, %s11, %s9
  $region1: #{residual_attention_block.1} parent=0
    #allocation2 [shape = 'u8[8192]{0}', space=vmem, size = 0x2000, scoped, tag = 'output window, operand 0, single buffered']
    #allocation3 [shape = 's32[1]{0}', space=sflag, size = 0x4, scoped, tag = 'scoped memory for residual_attention_block.1']
    %13 = vsyncpa [#allocation3], 0
    // Predicated region
    $region2: #{residual_attention_block.1} parent=1 // pred_check
      _
    $region3: #{residual_attention_block.1} parent=1 // pred_check_branch
      %15 = sbr.rel (0) target = $region5
    $region4: #{residual_attention_block.1} parent=1 // pred_region
      _
    $region5: #{residual_attention_block.1} parent=1 // pred_fallthru
      _
    // Predicated region
    $region6: #{residual_attention_block.1} parent=1 // pred_check
      _
    $region7: #{residual_attention_block.1} parent=1 // pred_check_branch
      %17 = sbr.rel (0) target = $region9
    $region8: #{residual_attention_block.1} parent=1 // pred_region
      _
    $region9: #{residual_attention_block.1} parent=1 // pred_fallthru
      _
    // Predicated region
    $region10: #{residual_attention_block.1} parent=1 // pred_check
      _
    $region11: #{residual_attention_block.1} parent=1 // pred_check_branch
      %19 = sbr.rel (0) target = $region13
    $region12: #{residual_attention_block.1} parent=1 // pred_region
      _
    $region13: #{residual_attention_block.1} parent=1 // pred_fallthru
      _
    // Predicated region
    $region14: #{residual_attention_block.1} parent=1 // pred_check
      _
    $region15: #{residual_attention_block.1} parent=1 // pred_check_branch
      %21 = sbr.rel (0) target = $region17
    $region16: #{residual_attention_block.1} parent=1 // pred_region
      _
    $region17: #{residual_attention_block.1} parent=1 // pred_fallthru
      _
    // Predicated region
    $region18: #{residual_attention_block.1} parent=1 // pred_check
      _
    $region19: #{residual_attention_block.1} parent=1 // pred_check_branch
      %23 = sbr.rel (0) target = $region21
    $region20: #{residual_attention_block.1} parent=1 // pred_region
      _
    $region21: #{residual_attention_block.1} parent=1 // pred_fallthru
      _
    // Predicated region
    $region22: #{residual_attention_block.1} parent=1 // pred_check
      _
    $region23: #{residual_attention_block.1} parent=1 // pred_check_branch
      %25 = sbr.rel (0) target = $region25
    $region24: #{residual_attention_block.1} parent=1 // pred_region
      _
    $region25: #{residual_attention_block.1} parent=1 // pred_fallthru
      _
    // Predicated region
    $region26: #{residual_attention_block.1} parent=1 // pred_check
      _
    $region27: #{residual_attention_block.1} parent=1 // pred_check_branch
      %27 = sbr.rel (0) target = $region29
    $region28: #{residual_attention_block.1} parent=1 // pred_region
      _
    $region29: #{residual_attention_block.1} parent=1 // pred_fallthru
      _
    // Predicated region
    $region30: #{residual_attention_block.1} parent=1 // pred_check
      _
    $region31: #{residual_attention_block.1} parent=1 // pred_check_branch
      %29 = sbr.rel (0) target = $region33
    $region32: #{residual_attention_block.1} parent=1 // pred_region
      _
    $region33: #{residual_attention_block.1} parent=1 // pred_fallthru
      _
    %v30 = vld [vmem:[%s0] sm:$0xff]
    %v31 = vld [vmem:[%s0 + $0x8] sm:$0xff]
    %v32 = vld [vmem:[%s1] sm:$0x1]
    %v33 = vld [vmem:[%s1 + $0x1] sm:$0x1]
    %v34 = vld [vmem:[%s1 + $0x2] sm:$0x1]
    %v35 = vld [vmem:[%s1 + $0x3] sm:$0x1]
    %v36 = vld [vmem:[%s1 + $0x4] sm:$0x1]
    %v37 = vld [vmem:[%s1 + $0x5] sm:$0x1]
    %v38 = vlaneseq
    %v39 = vshrl.u32 %v38, 7
    %v40 = vadd.s32 %v39, 8
    %v41 = vlaneseq
    %v42 = vand.u32 %v41, 127
    %vm43 = vcmp.lt.s32.totalorder %v39, 0
    %v44 = vsub.s32 0, %v39
    %v45 = vsel %vm43, %v44, %v39
    %v46 = vshrl.u32 %v45, 1
    %v47 = vand.u32 %v45, 1
    %v48 = vsub.s32 0, %v47
    %v49 = vsel %vm43, %v48, %v47
    %vm50 = vcmp.lt.s32.totalorder %v40, 0
    %v51 = vsub.s32 0, %v40
    %v52 = vsel %vm50, %v51, %v40
    %v53 = vshrl.u32 %v52, 1
    %v54 = vand.u32 %v52, 1
    %v55 = vsub.s32 0, %v54
    %v56 = vsel %vm50, %v55, %v54
    %vm57 = vcmp.ne.s32.totalorder %v49, 0
    %vm58 = vcmp.ne.s32.totalorder %v56, 0
    %vm59 = vcmp.lt.s32.totalorder %v49, 0
    %vm60 = vcmp.lt.s32.totalorder %v56, 0
    %vm61 = vmand %vm59, %vm57
    %vm62 = vmand %vm60, %vm58
    %v63 = vadd.s32 %v49, 2
    %v64 = vadd.s32 %v56, 2
    %v65 = vsel %vm61, %v63, %v49
    %v66 = vsel %vm62, %v64, %v56
    %vm67 = vcmp.lt.s32.totalorder %v42, 0
    %v68 = vsub.s32 0, %v42
    %v69 = vsel %vm67, %v68, %v42
    %v70 = vshrl.u32 %v69, 1
    %v71 = vand.u32 %v69, 1
    %v72 = vsub.s32 0, %v71
    %v73 = vsel %vm67, %v72, %v71
    %vm74 = vcmp.ne.s32.totalorder %v73, 0
    %vm75 = vcmp.lt.s32.totalorder %v73, 0
    %vm76 = vmand %vm75, %vm74
    %v77 = vadd.s32 %v73, 2
    %v78 = vsel %vm76, %v77, %v73
    %vm79 = vcmp.eq.s32.totalorder %v65, %v78
    %vm80 = vcmp.eq.s32.totalorder %v66, %v78
    %v81 = vsel %vm79, 0.0, -1e+30
    %v82 = vsel %vm80, 0.0, -1e+30
    %vm83 = vcmask 261120
    %v84 = vsel %vm83, %v30, 0.0
    %85 = vadd.xlane.f32.xlu0 %v84
    %v86 = vpop.xlane.xlu0 %85
    %v87 = vsel %vm83, %v31, 0.0
    %88 = vadd.xlane.f32.xlu0 %v87
    %v89 = vpop.xlane.xlu0 %88
    %v90 = vrcp.pop 32.0
    %v91 = vmul.f32 32.0, %v90
    %v92 = vsub.f32 1.0, %v91
    %v93 = vmul.f32 %v90, %v92
    %v94 = vadd.f32 %v90, %v93
    %vm95 = vweird.f32 %v90
    %v96 = vsel %vm95, %v90, %v94
    %v97 = vmul.f32 %v86, %v96
    %v98 = vmul.f32 %v89, %v96
    %v99 = vsub.f32 %v30, %v97
    %v100 = vsub.f32 %v31, %v98
    %v101 = vmul.f32 %v99, %v99
    %v102 = vmul.f32 %v100, %v100
    %v103 = vsel %vm83, %v101, 0.0
    %104 = vadd.xlane.f32.xlu0 %v103
    %v105 = vpop.xlane.xlu0 %104
    %v106 = vsel %vm83, %v102, 0.0
    %107 = vadd.xlane.f32.xlu0 %v106
    %v108 = vpop.xlane.xlu0 %107
    %v109 = vmul.f32 %v105, %v96
    %v110 = vmul.f32 %v108, %v96
    %v111 = vadd.f32 %v109, 1e-05
    %v112 = vadd.f32 %v110, 1e-05
    %v113 = vrsqrt.pop %v111
    %v114 = vmul.f32 %v113, %v111
    %v115 = vmul.f32 %v114, %v113
    %v116 = vmul.f32 0.5, %v115
    %v117 = vsub.f32 1.5, %v116
    %v118 = vmul.f32 %v113, %v117
    %vm119 = vweird.f32 %v111
    %vm120 = vweird.f32 %v113
    %vm121 = vmor %vm119, %vm120
    %v122 = vsel %vm121, %v113, %v118
    %v123 = vrsqrt.pop %v112
    %v124 = vmul.f32 %v123, %v112
    %v125 = vmul.f32 %v124, %v123
    %v126 = vmul.f32 0.5, %v125
    %v127 = vsub.f32 1.5, %v126
    %v128 = vmul.f32 %v123, %v127
    %vm129 = vweird.f32 %v112
    %vm130 = vweird.f32 %v123
    %vm131 = vmor %vm129, %vm130
    %v132 = vsel %vm131, %v123, %v128
    %v133 = vmul.f32 %v99, %v122
    %v134 = vmul.f32 %v100, %v132
    %v135 = vperm.slane %v32, 0
    %v136 = vmul.f32 %v133, %v135
    %v137 = vmul.f32 %v134, %v135
    %v138 = vperm.slane %v33, 0
    %v139 = vadd.f32 %v136, %v138
    %v140 = vadd.f32 %v137, %v138
    %v141 = vld [vmem:[%s2] sm:$0xff]
    %v142 = vld [vmem:[%s2 + $0x8] sm:$0xff]
    %v143 = vld [vmem:[%s2 + $0x10] sm:$0xff]
    %v144 = vld [vmem:[%s2 + $0x18] sm:$0xff]
    %v145 = vld [vmem:[%s3] sm:$0x1]
    %v147 = vperm.slane %v145, 0
    %v150 = vsel %vm83, %v139, 0
    %v153 = vsel %vm83, %v140, 0
    %155 = vmatpush.msra.mxu0 0.0
    %156 = vmatpush.msra.mxu0 0.0
    %157 = vmatpush.msra.mxu0 0.0
    %158 = vmatpush.msra.mxu0 0.0
    %159 = vmatpush.msra.mxu0 0.0
    %160 = vmatpush.msra.mxu0 0.0
    %161 = vmatpush.msra.mxu0 0.0
    %162 = vmatpush.msra.mxu0 0.0
    %163 = vmatpush.msra.mxu0 0.0
    %164 = vmatpush.msra.mxu0 0.0
    %165 = vmatpush.msra.mxu0 0.0
    %166 = vmatpush.msra.mxu0 0.0
    %167 = vmatpush.msra.mxu0 %v144
    %168 = vmatpush.msra.mxu0 %v143
    %169 = vmatpush.msra.mxu0 %v142
    %170 = vmatpush.msra.mxu0 %v141
    %171 = vmatmul.f32.gmra.mxu0 %v150
    %v172 = vpop.f32.mrf.mxu0
    %v173 = vadd.f32 %v147, %v172
    %174 = vmatmul.f32.gmra.mxu0 %v153
    %v175 = vpop.f32.mrf.mxu0
    %v176 = vadd.f32 %v147, %v175
    %177 = vdwg.mxu0
    %180 = vrot.lane.b32.xlu0 %v173, 96
    %v181 = vpop.permute.xlu0 %180
    %182 = vrot.lane.b32.xlu0 %v176, 96
    %v183 = vpop.permute.xlu0 %182
    %vm184 = vcmask 64512
    %v185 = vsel %vm184, %v173, 0
    %v187 = vsel %vm184, %v176, 0
    %v189 = vsel %vm184, %v181, 0
    %v191 = vsel %vm184, %v183, 0
    %193 = vmatpush.xpose.msra.mxu0 0.0
    %194 = vmatpush.xpose.msra.mxu0 0.0
    %195 = vmatpush.xpose.msra.mxu0 0.0
    %196 = vmatpush.xpose.msra.mxu0 0.0
    %197 = vmatpush.xpose.msra.mxu0 0.0
    %198 = vmatpush.xpose.msra.mxu0 0.0
    %199 = vmatpush.xpose.msra.mxu0 0.0
    %200 = vmatpush.xpose.msra.mxu0 0.0
    %201 = vmatpush.xpose.msra.mxu0 0.0
    %202 = vmatpush.xpose.msra.mxu0 0.0
    %203 = vmatpush.xpose.msra.mxu0 0.0
    %204 = vmatpush.xpose.msra.mxu0 0.0
    %205 = vmatpush.xpose.msra.mxu0 0.0
    %206 = vmatpush.xpose.msra.mxu0 0.0
    %207 = vmatpush.xpose.msra.mxu0 %v191
    %208 = vmatpush.xpose.msra.mxu0 %v189
    %209 = vmatmul.f32.gmra.mxu0 %v185
    %v210 = vpop.f32.mrf.mxu0
    %v211 = vadd.f32 %v81, %v210
    %212 = vmatmul.f32.gmra.mxu0 %v187
    %v213 = vpop.f32.mrf.mxu0
    %v214 = vadd.f32 %v82, %v213
    %215 = vdwg.mxu0
    %vm216 = vcmask 130048
    %v217 = vsel %vm216, %v211, -inf
    %218 = vmax.xlane.f32.xlu0 %v217
    %v219 = vpop.xlane.xlu0 %218
    %v220 = vsel %vm216, %v214, -inf
    %221 = vmax.xlane.f32.xlu0 %v220
    %v222 = vpop.xlane.xlu0 %221
    %v223 = vsub.f32 %v211, %v219
    %v224 = vsub.f32 %v214, %v222
    %v225 = vmul.f32 %v223, 1.442695
    %v226 = vpow.pop %v225
    %v227 = vmul.f32 %v224, 1.442695
    %v228 = vpow.pop %v227
    %v229 = vsel %vm216, %v226, 0.0
    %230 = vadd.xlane.f32.xlu0 %v229
    %v231 = vpop.xlane.xlu0 %230
    %v232 = vsel %vm216, %v228, 0.0
    %233 = vadd.xlane.f32.xlu0 %v232
    %v234 = vpop.xlane.xlu0 %233
    %v235 = vrcp.pop %v231
    %v236 = vmul.f32 %v231, %v235
    %v237 = vsub.f32 1.0, %v236
    %v238 = vmul.f32 %v235, %v237
    %v239 = vadd.f32 %v235, %v238
    %vm240 = vweird.f32 %v231
    %vm241 = vweird.f32 %v235
    %vm242 = vmor %vm240, %vm241
    %v243 = vsel %vm242, %v235, %v239
    %v244 = vand.u32 2147483647, %v231
    %vm245 = vcmp.eq.f32.partialorder %v244, 8.507059e+37
    %v246 = vand.u32 %v231, 2147483648
    %v247 = vor.u32 1.1754944e-38, %v246
    %v248 = vsel %vm245, %v247, %v243
    %v249 = vmul.f32 %v226, %v248
    %v250 = vrcp.pop %v234
    %v251 = vmul.f32 %v234, %v250
    %v252 = vsub.f32 1.0, %v251
    %v253 = vmul.f32 %v250, %v252
    %v254 = vadd.f32 %v250, %v253
    %vm255 = vweird.f32 %v234
    %vm256 = vweird.f32 %v250
    %vm257 = vmor %vm255, %vm256
    %v258 = vsel %vm257, %v250, %v254
    %v259 = vand.u32 2147483647, %v234
    %vm260 = vcmp.eq.f32.partialorder %v259, 8.507059e+37
    %v261 = vand.u32 %v234, 2147483648
    %v262 = vor.u32 1.1754944e-38, %v261
    %v263 = vsel %vm260, %v262, %v258
    %v264 = vmul.f32 %v228, %v263
    %265 = vrot.lane.b32.xlu0 %v173, 64
    %v266 = vpop.permute.xlu0 %265
    %267 = vrot.lane.b32.xlu0 %v176, 64
    %v268 = vpop.permute.xlu0 %267
    %v272 = vsel %vm216, %v249, 0
    %v275 = vsel %vm216, %v264, 0
    %277 = vmatpush.msra.mxu0 0.0
    %278 = vmatpush.msra.mxu0 0.0
    %279 = vmatpush.msra.mxu0 0.0
    %280 = vmatpush.msra.mxu0 0.0
    %281 = vmatpush.msra.mxu0 0.0
    %282 = vmatpush.msra.mxu0 0.0
    %283 = vmatpush.msra.mxu0 0.0
    %284 = vmatpush.msra.mxu0 0.0
    %285 = vmatpush.msra.mxu0 0.0
    %286 = vmatpush.msra.mxu0 0.0
    %287 = vmatpush.msra.mxu0 0.0
    %288 = vmatpush.msra.mxu0 0.0
    %289 = vmatpush.msra.mxu0 0.0
    %290 = vmatpush.msra.mxu0 0.0
    %291 = vmatpush.msra.mxu0 %v268
    %292 = vmatpush.msra.mxu0 %v266
    %293 = vmatmul.f32.gmra.mxu0 %v272
    %v294 = vpop.f32.mrf.mxu0
    %v295 = vadd.f32 0.0, %v294
    %296 = vmatmul.f32.gmra.mxu0 %v275
    %v297 = vpop.f32.mrf.mxu0
    %v298 = vadd.f32 0.0, %v297
    %299 = vdwg.mxu0
    %300 = vrot.lane.b32.xlu0 %v173, 120
    %v301 = vpop.permute.xlu0 %300
    %302 = vrot.lane.b32.xlu0 %v176, 120
    %v303 = vpop.permute.xlu0 %302
    %304 = vrot.lane.b32.xlu0 %v173, 88
    %v305 = vpop.permute.xlu0 %304
    %306 = vrot.lane.b32.xlu0 %v176, 88
    %v307 = vpop.permute.xlu0 %306
    %v308 = vsel %vm184, %v301, 0
    %v310 = vsel %vm184, %v303, 0
    %v312 = vsel %vm184, %v305, 0
    %v314 = vsel %vm184, %v307, 0
    %316 = vmatpush.xpose.msra.mxu0 0.0
    %317 = vmatpush.xpose.msra.mxu0 0.0
    %318 = vmatpush.xpose.msra.mxu0 0.0
    %319 = vmatpush.xpose.msra.mxu0 0.0
    %320 = vmatpush.xpose.msra.mxu0 0.0
    %321 = vmatpush.xpose.msra.mxu0 0.0
    %322 = vmatpush.xpose.msra.mxu0 0.0
    %323 = vmatpush.xpose.msra.mxu0 0.0
    %324 = vmatpush.xpose.msra.mxu0 0.0
    %325 = vmatpush.xpose.msra.mxu0 0.0
    %326 = vmatpush.xpose.msra.mxu0 0.0
    %327 = vmatpush.xpose.msra.mxu0 0.0
    %328 = vmatpush.xpose.msra.mxu0 0.0
    %329 = vmatpush.xpose.msra.mxu0 0.0
    %330 = vmatpush.xpose.msra.mxu0 %v314
    %331 = vmatpush.xpose.msra.mxu0 %v312
    %332 = vmatmul.f32.gmra.mxu0 %v308
    %v333 = vpop.f32.mrf.mxu0
    %v334 = vadd.f32 %v81, %v333
    %335 = vmatmul.f32.gmra.mxu0 %v310
    %v336 = vpop.f32.mrf.mxu0
    %v337 = vadd.f32 %v82, %v336
    %338 = vdwg.mxu0
    %v339 = vsel %vm216, %v334, -inf
    %340 = vmax.xlane.f32.xlu0 %v339
    %v341 = vpop.xlane.xlu0 %340
    %v342 = vsel %vm216, %v337, -inf
    %343 = vmax.xlane.f32.xlu0 %v342
    %v344 = vpop.xlane.xlu0 %343
    %v345 = vsub.f32 %v334, %v341
    %v346 = vsub.f32 %v337, %v344
    %v347 = vmul.f32 %v345, 1.442695
    %v348 = vpow.pop %v347
    %v349 = vmul.f32 %v346, 1.442695
    %v350 = vpow.pop %v349
    %v351 = vsel %vm216, %v348, 0.0
    %352 = vadd.xlane.f32.xlu0 %v351
    %v353 = vpop.xlane.xlu0 %352
    %v354 = vsel %vm216, %v350, 0.0
    %355 = vadd.xlane.f32.xlu0 %v354
    %v356 = vpop.xlane.xlu0 %355
    %v357 = vrcp.pop %v353
    %v358 = vmul.f32 %v353, %v357
    %v359 = vsub.f32 1.0, %v358
    %v360 = vmul.f32 %v357, %v359
    %v361 = vadd.f32 %v357, %v360
    %vm362 = vweird.f32 %v353
    %vm363 = vweird.f32 %v357
    %vm364 = vmor %vm362, %vm363
    %v365 = vsel %vm364, %v357, %v361
    %v366 = vand.u32 2147483647, %v353
    %vm367 = vcmp.eq.f32.partialorder %v366, 8.507059e+37
    %v368 = vand.u32 %v353, 2147483648
    %v369 = vor.u32 1.1754944e-38, %v368
    %v370 = vsel %vm367, %v369, %v365
    %v371 = vmul.f32 %v348, %v370
    %v372 = vrcp.pop %v356
    %v373 = vmul.f32 %v356, %v372
    %v374 = vsub.f32 1.0, %v373
    %v375 = vmul.f32 %v372, %v374
    %v376 = vadd.f32 %v372, %v375
    %vm377 = vweird.f32 %v356
    %vm378 = vweird.f32 %v372
    %vm379 = vmor %vm377, %vm378
    %v380 = vsel %vm379, %v372, %v376
    %v381 = vand.u32 2147483647, %v356
    %vm382 = vcmp.eq.f32.partialorder %v381, 8.507059e+37
    %v383 = vand.u32 %v356, 2147483648
    %v384 = vor.u32 1.1754944e-38, %v383
    %v385 = vsel %vm382, %v384, %v380
    %v386 = vmul.f32 %v350, %v385
    %387 = vrot.lane.b32.xlu0 %v173, 56
    %v388 = vpop.permute.xlu0 %387
    %389 = vrot.lane.b32.xlu0 %v176, 56
    %v390 = vpop.permute.xlu0 %389
    %v394 = vsel %vm216, %v371, 0
    %v397 = vsel %vm216, %v386, 0
    %399 = vmatpush.msra.mxu0 0.0
    %400 = vmatpush.msra.mxu0 0.0
    %401 = vmatpush.msra.mxu0 0.0
    %402 = vmatpush.msra.mxu0 0.0
    %403 = vmatpush.msra.mxu0 0.0
    %404 = vmatpush.msra.mxu0 0.0
    %405 = vmatpush.msra.mxu0 0.0
    %406 = vmatpush.msra.mxu0 0.0
    %407 = vmatpush.msra.mxu0 0.0
    %408 = vmatpush.msra.mxu0 0.0
    %409 = vmatpush.msra.mxu0 0.0
    %410 = vmatpush.msra.mxu0 0.0
    %411 = vmatpush.msra.mxu0 0.0
    %412 = vmatpush.msra.mxu0 0.0
    %413 = vmatpush.msra.mxu0 %v390
    %414 = vmatpush.msra.mxu0 %v388
    %415 = vmatmul.f32.gmra.mxu0 %v394
    %v416 = vpop.f32.mrf.mxu0
    %v417 = vadd.f32 0.0, %v416
    %418 = vmatmul.f32.gmra.mxu0 %v397
    %v419 = vpop.f32.mrf.mxu0
    %v420 = vadd.f32 0.0, %v419
    %421 = vdwg.mxu0
    %422 = vrot.lane.b32.xlu0 %v173, 112
    %v423 = vpop.permute.xlu0 %422
    %424 = vrot.lane.b32.xlu0 %v176, 112
    %v425 = vpop.permute.xlu0 %424
    %426 = vrot.lane.b32.xlu0 %v173, 80
    %v427 = vpop.permute.xlu0 %426
    %428 = vrot.lane.b32.xlu0 %v176, 80
    %v429 = vpop.permute.xlu0 %428
    %v430 = vsel %vm184, %v423, 0
    %v432 = vsel %vm184, %v425, 0
    %v434 = vsel %vm184, %v427, 0
    %v436 = vsel %vm184, %v429, 0
    %438 = vmatpush.xpose.msra.mxu0 0.0
    %439 = vmatpush.xpose.msra.mxu0 0.0
    %440 = vmatpush.xpose.msra.mxu0 0.0
    %441 = vmatpush.xpose.msra.mxu0 0.0
    %442 = vmatpush.xpose.msra.mxu0 0.0
    %443 = vmatpush.xpose.msra.mxu0 0.0
    %444 = vmatpush.xpose.msra.mxu0 0.0
    %445 = vmatpush.xpose.msra.mxu0 0.0
    %446 = vmatpush.xpose.msra.mxu0 0.0
    %447 = vmatpush.xpose.msra.mxu0 0.0
    %448 = vmatpush.xpose.msra.mxu0 0.0
    %449 = vmatpush.xpose.msra.mxu0 0.0
    %450 = vmatpush.xpose.msra.mxu0 0.0
    %451 = vmatpush.xpose.msra.mxu0 0.0
    %452 = vmatpush.xpose.msra.mxu0 %v436
    %453 = vmatpush.xpose.msra.mxu0 %v434
    %454 = vmatmul.f32.gmra.mxu0 %v430
    %v455 = vpop.f32.mrf.mxu0
    %v456 = vadd.f32 %v81, %v455
    %457 = vmatmul.f32.gmra.mxu0 %v432
    %v458 = vpop.f32.mrf.mxu0
    %v459 = vadd.f32 %v82, %v458
    %460 = vdwg.mxu0
    %v461 = vsel %vm216, %v456, -inf
    %462 = vmax.xlane.f32.xlu0 %v461
    %v463 = vpop.xlane.xlu0 %462
    %v464 = vsel %vm216, %v459, -inf
    %465 = vmax.xlane.f32.xlu0 %v464
    %v466 = vpop.xlane.xlu0 %465
    %v467 = vsub.f32 %v456, %v463
    %v468 = vsub.f32 %v459, %v466
    %v469 = vmul.f32 %v467, 1.442695
    %v470 = vpow.pop %v469
    %v471 = vmul.f32 %v468, 1.442695
    %v472 = vpow.pop %v471
    %v473 = vsel %vm216, %v470, 0.0
    %474 = vadd.xlane.f32.xlu0 %v473
    %v475 = vpop.xlane.xlu0 %474
    %v476 = vsel %vm216, %v472, 0.0
    %477 = vadd.xlane.f32.xlu0 %v476
    %v478 = vpop.xlane.xlu0 %477
    %v479 = vrcp.pop %v475
    %v480 = vmul.f32 %v475, %v479
    %v481 = vsub.f32 1.0, %v480
    %v482 = vmul.f32 %v479, %v481
    %v483 = vadd.f32 %v479, %v482
    %vm484 = vweird.f32 %v475
    %vm485 = vweird.f32 %v479
    %vm486 = vmor %vm484, %vm485
    %v487 = vsel %vm486, %v479, %v483
    %v488 = vand.u32 2147483647, %v475
    %vm489 = vcmp.eq.f32.partialorder %v488, 8.507059e+37
    %v490 = vand.u32 %v475, 2147483648
    %v491 = vor.u32 1.1754944e-38, %v490
    %v492 = vsel %vm489, %v491, %v487
    %v493 = vmul.f32 %v470, %v492
    %v494 = vrcp.pop %v478
    %v495 = vmul.f32 %v478, %v494
    %v496 = vsub.f32 1.0, %v495
    %v497 = vmul.f32 %v494, %v496
    %v498 = vadd.f32 %v494, %v497
    %vm499 = vweird.f32 %v478
    %vm500 = vweird.f32 %v494
    %vm501 = vmor %vm499, %vm500
    %v502 = vsel %vm501, %v494, %v498
    %v503 = vand.u32 2147483647, %v478
    %vm504 = vcmp.eq.f32.partialorder %v503, 8.507059e+37
    %v505 = vand.u32 %v478, 2147483648
    %v506 = vor.u32 1.1754944e-38, %v505
    %v507 = vsel %vm504, %v506, %v502
    %v508 = vmul.f32 %v472, %v507
    %509 = vrot.lane.b32.xlu0 %v173, 48
    %v510 = vpop.permute.xlu0 %509
    %511 = vrot.lane.b32.xlu0 %v176, 48
    %v512 = vpop.permute.xlu0 %511
    %v516 = vsel %vm216, %v493, 0
    %v519 = vsel %vm216, %v508, 0
    %521 = vmatpush.msra.mxu0 0.0
    %522 = vmatpush.msra.mxu0 0.0
    %523 = vmatpush.msra.mxu0 0.0
    %524 = vmatpush.msra.mxu0 0.0
    %525 = vmatpush.msra.mxu0 0.0
    %526 = vmatpush.msra.mxu0 0.0
    %527 = vmatpush.msra.mxu0 0.0
    %528 = vmatpush.msra.mxu0 0.0
    %529 = vmatpush.msra.mxu0 0.0
    %530 = vmatpush.msra.mxu0 0.0
    %531 = vmatpush.msra.mxu0 0.0
    %532 = vmatpush.msra.mxu0 0.0
    %533 = vmatpush.msra.mxu0 0.0
    %534 = vmatpush.msra.mxu0 0.0
    %535 = vmatpush.msra.mxu0 %v512
    %536 = vmatpush.msra.mxu0 %v510
    %537 = vmatmul.f32.gmra.mxu0 %v516
    %v538 = vpop.f32.mrf.mxu0
    %v539 = vadd.f32 0.0, %v538
    %540 = vmatmul.f32.gmra.mxu0 %v519
    %v541 = vpop.f32.mrf.mxu0
    %v542 = vadd.f32 0.0, %v541
    %543 = vdwg.mxu0
    %544 = vrot.lane.b32.xlu0 %v173, 104
    %v545 = vpop.permute.xlu0 %544
    %546 = vrot.lane.b32.xlu0 %v176, 104
    %v547 = vpop.permute.xlu0 %546
    %548 = vrot.lane.b32.xlu0 %v173, 72
    %v549 = vpop.permute.xlu0 %548
    %550 = vrot.lane.b32.xlu0 %v176, 72
    %v551 = vpop.permute.xlu0 %550
    %v552 = vsel %vm184, %v545, 0
    %v554 = vsel %vm184, %v547, 0
    %v556 = vsel %vm184, %v549, 0
    %v558 = vsel %vm184, %v551, 0
    %560 = vmatpush.xpose.msra.mxu0 0.0
    %561 = vmatpush.xpose.msra.mxu0 0.0
    %562 = vmatpush.xpose.msra.mxu0 0.0
    %563 = vmatpush.xpose.msra.mxu0 0.0
    %564 = vmatpush.xpose.msra.mxu0 0.0
    %565 = vmatpush.xpose.msra.mxu0 0.0
    %566 = vmatpush.xpose.msra.mxu0 0.0
    %567 = vmatpush.xpose.msra.mxu0 0.0
    %568 = vmatpush.xpose.msra.mxu0 0.0
    %569 = vmatpush.xpose.msra.mxu0 0.0
    %570 = vmatpush.xpose.msra.mxu0 0.0
    %571 = vmatpush.xpose.msra.mxu0 0.0
    %572 = vmatpush.xpose.msra.mxu0 0.0
    %573 = vmatpush.xpose.msra.mxu0 0.0
    %574 = vmatpush.xpose.msra.mxu0 %v558
    %575 = vmatpush.xpose.msra.mxu0 %v556
    %576 = vmatmul.f32.gmra.mxu0 %v552
    %v577 = vpop.f32.mrf.mxu0
    %v578 = vadd.f32 %v81, %v577
    %579 = vmatmul.f32.gmra.mxu0 %v554
    %v580 = vpop.f32.mrf.mxu0
    %v581 = vadd.f32 %v82, %v580
    %582 = vdwg.mxu0
    %v583 = vsel %vm216, %v578, -inf
    %584 = vmax.xlane.f32.xlu0 %v583
    %v585 = vpop.xlane.xlu0 %584
    %v586 = vsel %vm216, %v581, -inf
    %587 = vmax.xlane.f32.xlu0 %v586
    %v588 = vpop.xlane.xlu0 %587
    %v589 = vsub.f32 %v578, %v585
    %v590 = vsub.f32 %v581, %v588
    %v591 = vmul.f32 %v589, 1.442695
    %v592 = vpow.pop %v591
    %v593 = vmul.f32 %v590, 1.442695
    %v594 = vpow.pop %v593
    %v595 = vsel %vm216, %v592, 0.0
    %596 = vadd.xlane.f32.xlu0 %v595
    %v597 = vpop.xlane.xlu0 %596
    %v598 = vsel %vm216, %v594, 0.0
    %599 = vadd.xlane.f32.xlu0 %v598
    %v600 = vpop.xlane.xlu0 %599
    %v601 = vrcp.pop %v597
    %v602 = vmul.f32 %v597, %v601
    %v603 = vsub.f32 1.0, %v602
    %v604 = vmul.f32 %v601, %v603
    %v605 = vadd.f32 %v601, %v604
    %vm606 = vweird.f32 %v597
    %vm607 = vweird.f32 %v601
    %vm608 = vmor %vm606, %vm607
    %v609 = vsel %vm608, %v601, %v605
    %v610 = vand.u32 2147483647, %v597
    %vm611 = vcmp.eq.f32.partialorder %v610, 8.507059e+37
    %v612 = vand.u32 %v597, 2147483648
    %v613 = vor.u32 1.1754944e-38, %v612
    %v614 = vsel %vm611, %v613, %v609
    %v615 = vmul.f32 %v592, %v614
    %v616 = vrcp.pop %v600
    %v617 = vmul.f32 %v600, %v616
    %v618 = vsub.f32 1.0, %v617
    %v619 = vmul.f32 %v616, %v618
    %v620 = vadd.f32 %v616, %v619
    %vm621 = vweird.f32 %v600
    %vm622 = vweird.f32 %v616
    %vm623 = vmor %vm621, %vm622
    %v624 = vsel %vm623, %v616, %v620
    %v625 = vand.u32 2147483647, %v600
    %vm626 = vcmp.eq.f32.partialorder %v625, 8.507059e+37
    %v627 = vand.u32 %v600, 2147483648
    %v628 = vor.u32 1.1754944e-38, %v627
    %v629 = vsel %vm626, %v628, %v624
    %v630 = vmul.f32 %v594, %v629
    %631 = vrot.lane.b32.xlu0 %v173, 40
    %v632 = vpop.permute.xlu0 %631
    %633 = vrot.lane.b32.xlu0 %v176, 40
    %v634 = vpop.permute.xlu0 %633
    %v638 = vsel %vm216, %v615, 0
    %v641 = vsel %vm216, %v630, 0
    %643 = vmatpush.msra.mxu0 0.0
    %644 = vmatpush.msra.mxu0 0.0
    %645 = vmatpush.msra.mxu0 0.0
    %646 = vmatpush.msra.mxu0 0.0
    %647 = vmatpush.msra.mxu0 0.0
    %648 = vmatpush.msra.mxu0 0.0
    %649 = vmatpush.msra.mxu0 0.0
    %650 = vmatpush.msra.mxu0 0.0
    %651 = vmatpush.msra.mxu0 0.0
    %652 = vmatpush.msra.mxu0 0.0
    %653 = vmatpush.msra.mxu0 0.0
    %654 = vmatpush.msra.mxu0 0.0
    %655 = vmatpush.msra.mxu0 0.0
    %656 = vmatpush.msra.mxu0 0.0
    %657 = vmatpush.msra.mxu0 %v634
    %658 = vmatpush.msra.mxu0 %v632
    %659 = vmatmul.f32.gmra.mxu0 %v638
    %v660 = vpop.f32.mrf.mxu0
    %v661 = vadd.f32 0.0, %v660
    %662 = vmatmul.f32.gmra.mxu0 %v641
    %v663 = vpop.f32.mrf.mxu0
    %v664 = vadd.f32 0.0, %v663
    %665 = vdwg.mxu0
    %668 = vrot.lane.b32.xlu0 %v417, 8
    %v669 = vpop.permute.xlu0 %668
    %670 = vrot.lane.b32.xlu0 %v420, 8
    %v671 = vpop.permute.xlu0 %670
    %676 = vrot.lane.b32.xlu0 %v539, 16
    %v677 = vpop.permute.xlu0 %676
    %678 = vrot.lane.b32.xlu0 %v542, 16
    %v679 = vpop.permute.xlu0 %678
    %684 = vrot.lane.b32.xlu0 %v661, 24
    %v685 = vpop.permute.xlu0 %684
    %686 = vrot.lane.b32.xlu0 %v664, 24
    %v687 = vpop.permute.xlu0 %686
    %v690 = vsel %vm184, %v295, %v669
    %v691 = vsel %vm184, %v298, %v671
    %v692 = vsel %vm216, %v690, %v677
    %v693 = vsel %vm216, %v691, %v679
    %vm694 = vcmask 195584
    %v695 = vsel %vm694, %v692, %v685
    %v696 = vsel %vm694, %v693, %v687
    %v697 = vld [vmem:[%s4] sm:$0xff]
    %v698 = vld [vmem:[%s4 + $0x8] sm:$0xff]
    %v699 = vld [vmem:[%s4 + $0x10] sm:$0xff]
    %v700 = vld [vmem:[%s4 + $0x18] sm:$0xff]
    %v701 = vperm.slane %v36, 0
    %v703 = vsel %vm83, %v695, 0
    %v706 = vsel %vm83, %v696, 0
    %708 = vmatpush.msra.mxu0 0.0
    %709 = vmatpush.msra.mxu0 0.0
    %710 = vmatpush.msra.mxu0 0.0
    %711 = vmatpush.msra.mxu0 0.0
    %712 = vmatpush.msra.mxu0 0.0
    %713 = vmatpush.msra.mxu0 0.0
    %714 = vmatpush.msra.mxu0 0.0
    %715 = vmatpush.msra.mxu0 0.0
    %716 = vmatpush.msra.mxu0 0.0
    %717 = vmatpush.msra.mxu0 0.0
    %718 = vmatpush.msra.mxu0 0.0
    %719 = vmatpush.msra.mxu0 0.0
    %720 = vmatpush.msra.mxu0 %v700
    %721 = vmatpush.msra.mxu0 %v699
    %722 = vmatpush.msra.mxu0 %v698
    %723 = vmatpush.msra.mxu0 %v697
    %724 = vmatmul.f32.gmra.mxu0 %v703
    %v725 = vpop.f32.mrf.mxu0
    %v726 = vadd.f32 %v701, %v725
    %727 = vmatmul.f32.gmra.mxu0 %v706
    %v728 = vpop.f32.mrf.mxu0
    %v729 = vadd.f32 %v701, %v728
    %730 = vdwg.mxu0
    %v731 = vadd.f32 %v30, %v726
    %v732 = vadd.f32 %v31, %v729
    %v733 = vsel %vm83, %v731, 0.0
    %734 = vadd.xlane.f32.xlu0 %v733
    %v735 = vpop.xlane.xlu0 %734
    %v736 = vsel %vm83, %v732, 0.0
    %737 = vadd.xlane.f32.xlu0 %v736
    %v738 = vpop.xlane.xlu0 %737
    %v739 = vmul.f32 %v735, %v96
    %v740 = vmul.f32 %v738, %v96
    %v741 = vsub.f32 %v731, %v739
    %v742 = vsub.f32 %v732, %v740
    %v743 = vmul.f32 %v741, %v741
    %v744 = vmul.f32 %v742, %v742
    %v745 = vsel %vm83, %v743, 0.0
    %746 = vadd.xlane.f32.xlu0 %v745
    %v747 = vpop.xlane.xlu0 %746
    %v748 = vsel %vm83, %v744, 0.0
    %749 = vadd.xlane.f32.xlu0 %v748
    %v750 = vpop.xlane.xlu0 %749
    %v751 = vmul.f32 %v747, %v96
    %v752 = vmul.f32 %v750, %v96
    %v753 = vadd.f32 %v751, 1e-05
    %v754 = vadd.f32 %v752, 1e-05
    %v755 = vrsqrt.pop %v753
    %v756 = vmul.f32 %v755, %v753
    %v757 = vmul.f32 %v756, %v755
    %v758 = vmul.f32 0.5, %v757
    %v759 = vsub.f32 1.5, %v758
    %v760 = vmul.f32 %v755, %v759
    %vm761 = vweird.f32 %v753
    %vm762 = vweird.f32 %v755
    %vm763 = vmor %vm761, %vm762
    %v764 = vsel %vm763, %v755, %v760
    %v765 = vrsqrt.pop %v754
    %v766 = vmul.f32 %v765, %v754
    %v767 = vmul.f32 %v766, %v765
    %v768 = vmul.f32 0.5, %v767
    %v769 = vsub.f32 1.5, %v768
    %v770 = vmul.f32 %v765, %v769
    %vm771 = vweird.f32 %v754
    %vm772 = vweird.f32 %v765
    %vm773 = vmor %vm771, %vm772
    %v774 = vsel %vm773, %v765, %v770
    %v775 = vmul.f32 %v741, %v764
    %v776 = vmul.f32 %v742, %v774
    %v777 = vperm.slane %v34, 0
    %v778 = vmul.f32 %v775, %v777
    %v779 = vmul.f32 %v776, %v777
    %v780 = vperm.slane %v35, 0
    %v781 = vadd.f32 %v778, %v780
    %v782 = vadd.f32 %v779, %v780
    %v783 = vld [vmem:[%s5] sm:$0xff]
    %v784 = vld [vmem:[%s5 + $0x8] sm:$0xff]
    %v785 = vld [vmem:[%s5 + $0x10] sm:$0xff]
    %v786 = vld [vmem:[%s5 + $0x18] sm:$0xff]
    %v787 = vld [vmem:[%s6] sm:$0x1]
    %v789 = vperm.slane %v787, 0
    %v792 = vsel %vm83, %v781, 0
    %v795 = vsel %vm83, %v782, 0
    %797 = vmatpush.msra.mxu0 0.0
    %798 = vmatpush.msra.mxu0 0.0
    %799 = vmatpush.msra.mxu0 0.0
    %800 = vmatpush.msra.mxu0 0.0
    %801 = vmatpush.msra.mxu0 0.0
    %802 = vmatpush.msra.mxu0 0.0
    %803 = vmatpush.msra.mxu0 0.0
    %804 = vmatpush.msra.mxu0 0.0
    %805 = vmatpush.msra.mxu0 0.0
    %806 = vmatpush.msra.mxu0 0.0
    %807 = vmatpush.msra.mxu0 0.0
    %808 = vmatpush.msra.mxu0 0.0
    %809 = vmatpush.msra.mxu0 %v786
    %810 = vmatpush.msra.mxu0 %v785
    %811 = vmatpush.msra.mxu0 %v784
    %812 = vmatpush.msra.mxu0 %v783
    %813 = vmatmul.f32.gmra.mxu0 %v792
    %v814 = vpop.f32.mrf.mxu0
    %v815 = vadd.f32 %v789, %v814
    %816 = vmatmul.f32.gmra.mxu0 %v795
    %v817 = vpop.f32.mrf.mxu0
    %v818 = vadd.f32 %v789, %v817
    %819 = vdwg.mxu0
    %v820 = vmul.f32 %v815, 1.702
    %v821 = vmul.f32 %v818, 1.702
    %v822 = vxor.u32 %v820, 2147483648
    %v823 = vxor.u32 %v821, 2147483648
    %v824 = vmul.f32 %v822, 1.442695
    %v825 = vpow.pop %v824
    %v826 = vmul.f32 %v823, 1.442695
    %v827 = vpow.pop %v826
    %v828 = vadd.f32 %v825, 1.0
    %v829 = vadd.f32 %v827, 1.0
    %v830 = vrcp.pop %v828
    %v831 = vmul.f32 %v828, %v830
    %v832 = vsub.f32 1.0, %v831
    %v833 = vmul.f32 %v830, %v832
    %v834 = vadd.f32 %v830, %v833
    %vm835 = vweird.f32 %v828
    %vm836 = vweird.f32 %v830
    %vm837 = vmor %vm835, %vm836
    %v838 = vsel %vm837, %v830, %v834
    %v839 = vand.u32 2147483647, %v828
    %vm840 = vcmp.eq.f32.partialorder %v839, 8.507059e+37
    %v841 = vand.u32 %v828, 2147483648
    %v842 = vor.u32 1.1754944e-38, %v841
    %v843 = vsel %vm840, %v842, %v838
    %v844 = vmul.f32 1.0, %v843
    %v845 = vrcp.pop %v829
    %v846 = vmul.f32 %v829, %v845
    %v847 = vsub.f32 1.0, %v846
    %v848 = vmul.f32 %v845, %v847
    %v849 = vadd.f32 %v845, %v848
    %vm850 = vweird.f32 %v829
    %vm851 = vweird.f32 %v845
    %vm852 = vmor %vm850, %vm851
    %v853 = vsel %vm852, %v845, %v849
    %v854 = vand.u32 2147483647, %v829
    %vm855 = vcmp.eq.f32.partialorder %v854, 8.507059e+37
    %v856 = vand.u32 %v829, 2147483648
    %v857 = vor.u32 1.1754944e-38, %v856
    %v858 = vsel %vm855, %v857, %v853
    %v859 = vmul.f32 1.0, %v858
    %v860 = vmul.f32 %v815, %v844
    %v861 = vmul.f32 %v818, %v859
    %v862 = vld [vmem:[%s7] sm:$0xff]
    %v863 = vld [vmem:[%s7 + $0x8] sm:$0xff]
    %v864 = vld [vmem:[%s7 + $0x10] sm:$0xff]
    %v865 = vld [vmem:[%s7 + $0x18] sm:$0xff]
    %v866 = vld [vmem:[%s7 + $0x20] sm:$0xff]
    %v867 = vld [vmem:[%s7 + $0x28] sm:$0xff]
    %v868 = vld [vmem:[%s7 + $0x30] sm:$0xff]
    %v869 = vld [vmem:[%s7 + $0x38] sm:$0xff]
    %v870 = vld [vmem:[%s7 + $0x40] sm:$0xff]
    %v871 = vld [vmem:[%s7 + $0x48] sm:$0xff]
    %v872 = vld [vmem:[%s7 + $0x50] sm:$0xff]
    %v873 = vld [vmem:[%s7 + $0x58] sm:$0xff]
    %v874 = vld [vmem:[%s7 + $0x60] sm:$0xff]
    %v875 = vld [vmem:[%s7 + $0x68] sm:$0xff]
    %v876 = vld [vmem:[%s7 + $0x70] sm:$0xff]
    %v877 = vld [vmem:[%s7 + $0x78] sm:$0xff]
    %v878 = vperm.slane %v37, 0
    %879 = vmatpush.msra.mxu0 %v877
    %880 = vmatpush.msra.mxu0 %v876
    %881 = vmatpush.msra.mxu0 %v875
    %882 = vmatpush.msra.mxu0 %v874
    %883 = vmatpush.msra.mxu0 %v873
    %884 = vmatpush.msra.mxu0 %v872
    %885 = vmatpush.msra.mxu0 %v871
    %886 = vmatpush.msra.mxu0 %v870
    %887 = vmatpush.msra.mxu0 %v869
    %888 = vmatpush.msra.mxu0 %v868
    %889 = vmatpush.msra.mxu0 %v867
    %890 = vmatpush.msra.mxu0 %v866
    %891 = vmatpush.msra.mxu0 %v865
    %892 = vmatpush.msra.mxu0 %v864
    %893 = vmatpush.msra.mxu0 %v863
    %894 = vmatpush.msra.mxu0 %v862
    %895 = vmatmul.f32.gmra.mxu0 %v860
    %v896 = vpop.f32.mrf.mxu0
    %v897 = vadd.f32 %v878, %v896
    %898 = vmatmul.f32.gmra.mxu0 %v861
    %v899 = vpop.f32.mrf.mxu0
    %v900 = vadd.f32 %v878, %v899
    %901 = vdwg.mxu0
    %v902 = vadd.f32 %v731, %v897
    %v903 = vadd.f32 %v732, %v900
    %904 = vst.msk [vmem:[#allocation2] sm:$0xff] %vm83, %v902
    %905 = vst.msk [vmem:[#allocation2 + $0x8] sm:$0xff] %vm83, %v903
    // Predicated region
    $region34: #{residual_attention_block.1} parent=1 // pred_check
      _
    $region35: #{residual_attention_block.1} parent=1 // pred_check_branch
      %907 = sbr.rel (0) target = $region37
    $region36: #{residual_attention_block.1} parent=1 // pred_region
      %909 = vsyncadd [#allocation3], 0
      %s910 = sshll.u32 [#allocation2], 4
      %s911 = int_to_ptr.vmem [resolvable:$true] %s910
      %s912 = sshll.u32 %s8, 4
      %s913 = int_to_ptr.hbm [resolvable:$true] %s912
      %918 = dma.vmem_to_hbm [thread:$0]  %s911, 256, %s913, [#allocation3], 128, 128, 8
    $region37: #{residual_attention_block.1} parent=1 // pred_fallthru
      _
    // Predicated region
    $region38: #{residual_attention_block.1} parent=1 // pred_check
      _
    $region39: #{residual_attention_block.1} parent=1 // pred_check_branch
      %920 = sbr.rel (0) target = $region41
    $region40: #{residual_attention_block.1} parent=1 // pred_region
      %922 = dma.done [#allocation3], 256
    $region41: #{residual_attention_block.1} parent=1 // pred_fallthru
      _
    %923 = vsyncpa [#allocation3], 1

</llo_original>
